<compile_context>
chip_gen: v7x
topology: tpu7x:2x2x1
jax: 0.10.0
libtpu: 0.0.40
codegen_flags: <defaults>
</compile_context>

<pallas_src>
import functools

import jax
import jax.numpy as jnp
from jax.experimental import pallas as pl
from jax.experimental.pallas import tpu as pltpu


# ------------------------------ tiling helpers ------------------------------

def _pick_row_tile(num_rows, hidden, target_bytes=1 << 20, max_rows=1024):
    """Rows per block: ~1 MiB f32 blocks, multiple of 8, capped at 1024 rows.

    Sized conservatively so that even the 4-operand residual/dropout kernel
    (x, sub, bits, out) with double buffering stays far below v7x's 32 MiB
    default scoped-VMEM limit for any hidden size.
    """
    rows = max(8, min(max_rows, target_bytes // max(hidden * 4, 1)))
    rows = (rows // 8) * 8
    if rows >= num_rows:
        return num_rows          # block == full extent (always legal)
    return rows


def _pick_col_tile(dim):
    """Output-column tile for the fused matmul path (lane-dense, 128-aligned)."""
    if dim % 256 == 0:
        return 256
    if dim % 128 == 0:
        return 128
    return dim


# ------------------------------- RMSNorm kernel ------------------------------

def _rmsnorm_kernel(x_ref, w_ref, o_ref, *, eps):
    x = x_ref[...].astype(jnp.float32)
    ms = jnp.mean(x * x, axis=-1, keepdims=True)       # mean(x^2, dim=-1)
    inv = jax.lax.rsqrt(ms + eps)                       # EUP rsqrt, no vector divide
    o_ref[...] = (x * inv * w_ref[...].astype(jnp.float32)).astype(o_ref.dtype)


def rmsnorm(x2d, weight, eps=1e-6):
    R, D = x2d.shape
    tr = _pick_row_tile(R, D)
    return pl.pallas_call(
        functools.partial(_rmsnorm_kernel, eps=float(eps)),
        out_shape=jax.ShapeDtypeStruct((R, D), x2d.dtype),
        grid=(pl.cdiv(R, tr),),
        in_specs=[
            pl.BlockSpec((tr, D), lambda i: (i, 0)),
            pl.BlockSpec((1, D), lambda i: (0, 0)),     # weight reused across row tiles
        ],
        out_specs=pl.BlockSpec((tr, D), lambda i: (i, 0)),
        compiler_params=pltpu.CompilerParams(dimension_semantics=("parallel",)),
    )(x2d, weight.reshape(1, D))


# ------------------------- residual (+ dropout) kernels -----------------------

def _residual_add_kernel(x_ref, y_ref, o_ref):
    o_ref[...] = (x_ref[...].astype(jnp.float32)
                  + y_ref[...].astype(jnp.float32)).astype(o_ref.dtype)


def _residual_dropout_kernel(x_ref, y_ref, bits_ref, o_ref, *, threshold, inv_keep):
    x = x_ref[...].astype(jnp.float32)
    y = y_ref[...].astype(jnp.float32)
    keep = bits_ref[...] >= jnp.uint32(threshold)       # one int compare + select
    o_ref[...] = (x + jnp.where(keep, y * inv_keep, 0.0)).astype(o_ref.dtype)


def residual_dropout_add(x2d, sub2d, rate, key=None):
    R, D = x2d.shape
    tr = _pick_row_tile(R, D)
    grid = (pl.cdiv(R, tr),)
    row_spec = pl.BlockSpec((tr, D), lambda i: (i, 0))
    cp = pltpu.CompilerParams(dimension_semantics=("parallel",))
    out_shape = jax.ShapeDtypeStruct((R, D), x2d.dtype)

    if rate <= 0.0:
        return pl.pallas_call(
            _residual_add_kernel,
            out_shape=out_shape, grid=grid,
            in_specs=[row_spec, row_spec], out_specs=row_spec,
            compiler_params=cp,
        )(x2d, sub2d)

    # TODO(synk): on real TPU silicon the mask could come from the in-kernel HW PRNG
    # (pltpu.prng_seed / prng_random_bits), avoiding this extra uint32 (R, D) HBM read;
    # those primitives do not lower under the interpret/CPU path, so bits are host-side.
    if key is None:
        key = jax.random.PRNGKey(0)
    bits = jax.random.bits(key, (R, D), dtype=jnp.uint32)
    threshold = min(int(round(rate * (1 << 32))), (1 << 32) - 1)
    inv_keep = 1.0 / (1.0 - rate)
    return pl.pallas_call(
        functools.partial(_residual_dropout_kernel,
                          threshold=threshold, inv_keep=inv_keep),
        out_shape=out_shape, grid=grid,
        in_specs=[row_spec, row_spec, row_spec],
        out_specs=row_spec,
        compiler_params=cp,
    )(x2d, sub2d, bits)


# --------------- fused path: RMSNorm + linear + dropout + residual -----------

def _make_fused_linear_kernel(eps, col_tile, threshold, inv_keep):
    use_dropout = threshold is not None

    def kernel(x_ref, wn_ref, wl_ref, *rest):
        if use_dropout:
            bits_ref, o_ref = rest
        else:
            (o_ref,) = rest
        j = pl.program_id(1)
        x = x_ref[...].astype(jnp.float32)                     # (tm, D) full row
        ms = jnp.mean(x * x, axis=-1, keepdims=True)
        inv = jax.lax.rsqrt(ms + eps)
        normed = x * inv * wn_ref[...].astype(jnp.float32)     # RMSNorm on the fly
        y = jnp.dot(normed.astype(wl_ref.dtype), wl_ref[...],  # MXU matmul
                    preferred_element_type=jnp.float32)        # (tm, tn)
        if use_dropout:
            keep = bits_ref[...] >= jnp.uint32(threshold)
            y = jnp.where(keep, y * inv_keep, 0.0)
        # residual: matching column slice of the already-resident x row block
        x_res = x_ref[:, pl.ds(j * col_tile, col_tile)].astype(jnp.float32)
        o_ref[...] = (x_res + y).astype(o_ref.dtype)

    return kernel


def fused_rmsnorm_linear_residual_dropout(x2d, norm_weight, w_lin, *, eps, rate, key=None):
    R, D = x2d.shape
    Dk, Do = w_lin.shape
    assert Dk == D and Do == D, "fused path requires a square D -> D linear sublayer"
    tm = _pick_row_tile(R, D)
    tn = _pick_col_tile(D)
    grid = (pl.cdiv(R, tm), pl.cdiv(D, tn))

    x_spec = pl.BlockSpec((tm, D), lambda i, j: (i, 0))
    wn_spec = pl.BlockSpec((1, D), lambda i, j: (0, 0))
    wl_spec = pl.BlockSpec((D, tn), lambda i, j: (0, j))
    out_spec = pl.BlockSpec((tm, tn), lambda i, j: (i, j))
    cp = pltpu.CompilerParams(dimension_semantics=("parallel", "parallel"))

    if rate > 0.0:
        if key is None:
            key = jax.random.PRNGKey(0)
        bits = jax.random.bits(key, (R, D), dtype=jnp.uint32)
        threshold = min(int(round(rate * (1 << 32))), (1 << 32) - 1)
        inv_keep = 1.0 / (1.0 - rate)
        kernel = _make_fused_linear_kernel(float(eps), tn, threshold, inv_keep)
        in_specs = [x_spec, wn_spec, wl_spec,
                    pl.BlockSpec((tm, tn), lambda i, j: (i, j))]
        args = (x2d, norm_weight.reshape(1, D), w_lin, bits)
    else:
        kernel = _make_fused_linear_kernel(float(eps), tn, None, None)
        in_specs = [x_spec, wn_spec, wl_spec]
        args = (x2d, norm_weight.reshape(1, D), w_lin)

    return pl.pallas_call(
        kernel,
        out_shape=jax.ShapeDtypeStruct((R, D), x2d.dtype),
        grid=grid,
        in_specs=in_specs,
        out_specs=out_spec,
        compiler_params=cp,
    )(*args)


# ----------------------------- SublayerConnection ----------------------------

class SublayerConnection:
    """x + dropout(sublayer(RMSNorm(x))) -- pre-norm residual block."""

    def __init__(self, size, dropout, eps=1e-6):
        assert 0.0 <= float(dropout) <= 1.0
        self.size = int(size)
        self.dropout = float(dropout)
        self.eps = float(eps)
        self.norm_weight = jnp.ones((size,), dtype=jnp.float32)   # RMSNorm init

    def __call__(self, x, sublayer, dropout_key=None):
        """Generic path: works with any sublayer callable (two Pallas kernels)."""
        B, S, D = x.shape
        if self.dropout >= 1.0:           # p=1 drops the whole sublayer branch
            return x
        x2d = x.reshape(B * S, D)
        normed = rmsnorm(x2d, self.norm_weight, self.eps)                 # kernel 1
        sub_out = sublayer(normed.reshape(B, S, D)).reshape(B * S, D)     # external
        out = residual_dropout_add(x2d, sub_out, self.dropout, dropout_key)  # kernel 2
        return out.reshape(B, S, D)

    def fused_linear(self, x, w_lin, dropout_key=None):
        """Fast path when sublayer(h) == h @ w_lin (D -> D): one fused kernel."""
        B, S, D = x.shape
        if self.dropout >= 1.0:
            return x
        out = fused_rmsnorm_linear_residual_dropout(
            x.reshape(B * S, D), self.norm_weight, w_lin,
            eps=self.eps, rate=self.dropout, key=dropout_key)
        return out.reshape(B, S, D)


# ------------------------------------ demo -----------------------------------

if __name__ == "__main__":
    B, S, D = 2, 8, 128
    key = jax.random.PRNGKey(0)
    kx, kw, kd = jax.random.split(key, 3)
    x = jax.random.normal(kx, (B, S, D), dtype=jnp.float32)

    # Deterministic example sublayer: linear projection D -> D.
    w_lin = jax.random.normal(kw, (D, D), dtype=jnp.float32) * (1.0 / D ** 0.5)
    sublayer = lambda h: jnp.dot(h, w_lin)

    def ref(xv):
        rms = jnp.sqrt(jnp.mean(xv * xv, axis=-1, keepdims=True) + 1e-6)
        return xv + jnp.dot(xv / rms, w_lin)

    expected = ref(x)

    # --- deterministic (dropout = 0) checks: generic and fused paths ---
    blk0 = SublayerConnection(size=D, dropout=0.0)
    out_generic = jax.block_until_ready(blk0(x, sublayer))
    assert jnp.allclose(out_generic, expected, atol=1e-4, rtol=1e-4), \
        "generic path mismatch vs reference"

    out_fused = jax.block_until_ready(blk0.fused_linear(x, w_lin))
    assert jnp.allclose(out_fused, expected, atol=1e-4, rtol=1e-4), \
        "fused path mismatch vs reference"

    # --- training-mode dropout path (both variants) ---
    blk = SublayerConnection(size=D, dropout=0.1)
    out_d1 = jax.block_until_ready(blk(x, sublayer, dropout_key=kd))
    out_d2 = jax.block_until_ready(blk.fused_linear(x, w_lin, dropout_key=kd))
    assert out_d1.shape == (B, S, D) and out_d2.shape == (B, S, D)
    assert bool(jnp.all(jnp.isfinite(out_d1))) and bool(jnp.all(jnp.isfinite(out_d2)))

    print("KERNEL_OK")
</pallas_src>

<mosaic_0001>
module attributes {stable_mosaic.version = 11 : i64} {
  func.func @_rmsnorm_kernel(%arg0: i32, %arg1: memref<16x128xf32, #tpu.memory_space<vmem>>, %arg2: memref<1x128xf32, #tpu.memory_space<vmem>>, %arg3: memref<16x128xf32, #tpu.memory_space<vmem>>) attributes {dimension_semantics = [#tpu.dimension_semantics<parallel>], iteration_bounds = array<i64: 1>, scalar_prefetch = 0 : i64, scratch_operands = 0 : i64, tpu.core_type = #tpu.core_type<tc>, window_params = [{transform_indices = @transform_0, window_bounds = array<i64: 16, 128>}, {pipeline_mode = #tpu.pipeline_mode<synchronous>, transform_indices = @transform_1, window_bounds = array<i64: 1, 128>}, {transform_indices = @transform_2, window_bounds = array<i64: 16, 128>}]} {
    %c0 = arith.constant 0 : index
    %c0_0 = arith.constant 0 : index
    %0 = vector.load %arg1[%c0, %c0_0] : memref<16x128xf32, #tpu.memory_space<vmem>>, vector<16x128xf32>
    %1 = arith.mulf %0, %0 : vector<16x128xf32>
    %cst = arith.constant dense<0.000000e+00> : vector<16xf32>
    %2 = vector.multi_reduction <add>, %1, %cst [1] : vector<16x128xf32> to vector<16xf32>
    %3 = vector.shape_cast %2 : vector<16xf32> to vector<16x1xf32>
    %cst_1 = arith.constant 1.280000e+02 : f32
    %4 = vector.broadcast %cst_1 : f32 to vector<16x1xf32>
    %5 = arith.divf %3, %4 : vector<16x1xf32>
    %cst_2 = arith.constant 9.99999997E-7 : f32
    %6 = vector.broadcast %cst_2 : f32 to vector<16x1xf32>
    %7 = arith.addf %5, %6 : vector<16x1xf32>
    %8 = math.rsqrt %7 : vector<16x1xf32>
    %9 = vector.broadcast %8 : vector<16x1xf32> to vector<16x128xf32>
    %10 = arith.mulf %0, %9 : vector<16x128xf32>
    %c0_3 = arith.constant 0 : index
    %c0_4 = arith.constant 0 : index
    %11 = vector.load %arg2[%c0_3, %c0_4] : memref<1x128xf32, #tpu.memory_space<vmem>>, vector<1x128xf32>
    %12 = vector.broadcast %11 : vector<1x128xf32> to vector<16x128xf32>
    %13 = arith.mulf %10, %12 : vector<16x128xf32>
    %c0_5 = arith.constant 0 : index
    %c0_6 = arith.constant 0 : index
    %14 = vector.load %arg3[%c0_5, %c0_6] : memref<16x128xf32, #tpu.memory_space<vmem>>, vector<16x128xf32>
    tpu.vector_store %arg3[%c0_5, %c0_6], %13 {strides = array<i32>} : memref<16x128xf32, #tpu.memory_space<vmem>>, vector<16x128xf32>,
    return
  }
  func.func @transform_0(%arg0: i32) -> (i32, i32) {
    %c0_i32 = arith.constant 0 : i32
    %c0_i32_0 = arith.constant 0 : i32
    return %arg0, %c0_i32 : i32, i32
  }
  func.func @transform_1(%arg0: i32) -> (i32, i32) {
    %c0_i32 = arith.constant 0 : i32
    %c0_i32_0 = arith.constant 0 : i32
    %c0_i32_1 = arith.constant 0 : i32
    return %c0_i32, %c0_i32_0 : i32, i32
  }
  func.func @transform_2(%arg0: i32) -> (i32, i32) {
    %c0_i32 = arith.constant 0 : i32
    %c0_i32_0 = arith.constant 0 : i32
    return %arg0, %c0_i32 : i32, i32
  }
}

</mosaic_0001>

<llo_original>
// kernel: tpu_custom_call.1
$region0: #{tpu_custom_call.1}
  #allocation0 [shape = 'u32[]', space=smem, size = 0x4, offset = 0x4, fixed_abs, tag = 'smem constant byte address 0x4 - core index']
  #allocation1 [shape = 'u32[144,128]{1,0:T(1,128)}', space=vmem, size = 0x12000, scoped, tag = 'internal scratch']
  %s0 = inlined_call_operand.hbm [shape: f32[16,128], index: 0, kind: input, shape index: {}]
  %s1 = inlined_call_operand.vmem [shape: f32[1,128], index: 1, kind: input, shape index: {}]
  %s2 = inlined_call_operand.hbm [shape: f32[16,128], index: 2, kind: output, shape index: {}]
  %s3 = sld [smem:[#allocation0]]
  $region22: #{tpu_custom_call.1} parent=0
    _
  %s5 = ssub.s32 1, %s3
  %s6 = scalar_select 0, %s5, %s3
  $region1: #{tpu_custom_call.1} parent=0
    #allocation2 [shape = 'u8[8192]{0}', space=vmem, size = 0x2000, scoped, tag = 'input window, operand 0, single buffered']
    #allocation3 [shape = 's32[1]{0}', space=sflag, size = 0x4, scoped, tag = 'scoped memory for tpu_custom_call.1']
    #allocation4 [shape = 's32[1]{0}', space=sflag, size = 0x4, scoped, tag = 'scoped memory for tpu_custom_call.1']
    #allocation5 [shape = 'u8[8192]{0}', space=vmem, size = 0x2000, scoped, tag = 'output window, operand 0, single buffered']
    %7 = vsyncpa [#allocation3], 0
    %8 = vsyncpa [#allocation4], 0
    // Predicated region
    $region2: #{tpu_custom_call.1} parent=1 // pred_check
      _
    $region3: #{tpu_custom_call.1} parent=1 // pred_check_branch
      %10 = sbr.rel (0) target = $region5
    $region4: #{tpu_custom_call.1} parent=1 // pred_region
      %s12 = ssub.s32 256, 256
      %13 = vsyncadd [#allocation3], %s12
      %s14 = sshll.u32 [#allocation2], 4
      %s15 = int_to_ptr.vmem [resolvable:$true] %s14
      %20 = dma.hbm_to_vmem [thread:$0]  %s0, 256, %s15, [#allocation3], 128, 128, 8
    $region5: #{tpu_custom_call.1} parent=1 // pred_fallthru
      _
    // Predicated region
    $region6: #{tpu_custom_call.1} parent=1 // pred_check
      _
    $region7: #{tpu_custom_call.1} parent=1 // pred_check_branch
      %22 = sbr.rel (0) target = $region9
    $region8: #{tpu_custom_call.1} parent=1 // pred_region
      _
    $region9: #{tpu_custom_call.1} parent=1 // pred_fallthru
      _
    // Predicated region
    $region10: #{tpu_custom_call.1} parent=1 // pred_check
      _
    $region11: #{tpu_custom_call.1} parent=1 // pred_check_branch
      %24 = sbr.rel (0) target = $region13
    $region12: #{tpu_custom_call.1} parent=1 // pred_region
      %25 = dma.done [#allocation3], 256
    $region13: #{tpu_custom_call.1} parent=1 // pred_fallthru
      _
    %v26 = vld [vmem:[#allocation2] sm:$0xff]
    %v27 = vld [vmem:[#allocation2 + $0x8] sm:$0xff]
    %v28 = vmul.f32 %v26, %v26
    %v29 = vmul.f32 %v27, %v27
    %30 = vadd.xlane.f32.xlu0 %v28
    %v31 = vpop.xlane.xlu0 %30
    %32 = vadd.xlane.f32.xlu0 %v29
    %v33 = vpop.xlane.xlu0 %32
    %v34 = vrcp.pop 128.0
    %v35 = vmul.f32 %v31, %v34
    %v36 = vmul.f32 %v33, %v34
    %v37 = vadd.f32 %v35, 1e-06
    %v38 = vadd.f32 %v36, 1e-06
    %v39 = vrsqrt.pop %v37
    %v40 = vrsqrt.pop %v38
    %v41 = vmul.f32 %v26, %v39
    %v42 = vmul.f32 %v27, %v40
    %v43 = vld [vmem:[%s1] sm:$0x1]
    %v45 = vlaneseq
    %v46 = vshrl.u32 %v45, 7
    %v47 = vsub.s32 0, %v46
    %v48 = vrot.slane %v43, %v47
    %v50 = vmul.f32 %v41, %v48
    %v51 = vmul.f32 %v42, %v48
    %52 = vst [vmem:[#allocation5] sm:$0xff] %v50
    %53 = vst [vmem:[#allocation5 + $0x8] sm:$0xff] %v51
    // Predicated region
    $region14: #{tpu_custom_call.1} parent=1 // pred_check
      _
    $region15: #{tpu_custom_call.1} parent=1 // pred_check_branch
      %55 = sbr.rel (0) target = $region17
    $region16: #{tpu_custom_call.1} parent=1 // pred_region
      %s57 = ssub.s32 256, 256
      %58 = vsyncadd [#allocation4], %s57
      %s59 = sshll.u32 [#allocation5], 4
      %s60 = int_to_ptr.vmem [resolvable:$true] %s59
      %65 = dma.vmem_to_hbm [thread:$0]  %s60, 256, %s2, [#allocation4], 128, 128, 8
    $region17: #{tpu_custom_call.1} parent=1 // pred_fallthru
      _
    // Predicated region
    $region18: #{tpu_custom_call.1} parent=1 // pred_check
      _
    $region19: #{tpu_custom_call.1} parent=1 // pred_check_branch
      %67 = sbr.rel (0) target = $region21
    $region20: #{tpu_custom_call.1} parent=1 // pred_region
      %68 = dma.done [#allocation4], 256
    $region21: #{tpu_custom_call.1} parent=1 // pred_fallthru
      _
    %69 = vsyncpa [#allocation3], 1
    %70 = vsyncpa [#allocation4], 1

</llo_original>
